<compile_context>
chip_gen: v7x
topology: tpu7x:2x2x1
jax: 0.10.0
libtpu: 0.0.40
codegen_flags: <defaults>
</compile_context>

<pallas_src>
from typing import NamedTuple

import numpy as np
import jax
import jax.numpy as jnp
from jax.experimental import pallas as pl
from jax.experimental.pallas import tpu as pltpu


# ----------------------------- CSR glue (numpy) --------------------------------

def to_csr_2d(dense_weight: np.ndarray):
    """Mimics sparseprop's to_csr_2d: returns (W_val, (indptr, indices))."""
    n, m = dense_weight.shape
    vals, indices, indptr = [], [], [0]
    for r in range(n):
        row = dense_weight[r]
        nz = np.nonzero(row)[0]
        vals.extend(row[nz].tolist())
        indices.extend(nz.tolist())
        indptr.append(len(vals))
    return (np.asarray(vals, dtype=np.float32),
            (np.asarray(indptr, dtype=np.int32), np.asarray(indices, dtype=np.int32)))


def from_csr_2d(w_val: np.ndarray, w_idx, shape):
    """Reconstruct dense (N, M) weight from CSR."""
    indptr, indices = w_idx
    n, m = shape
    dense = np.zeros((n, m), dtype=np.float32)
    for r in range(n):
        s, e = int(indptr[r]), int(indptr[r + 1])
        dense[r, indices[s:e]] = w_val[s:e]
    return dense


def _round_up(x: int, m: int) -> int:
    return ((x + m - 1) // m) * m


# ----------------------- one-time weight preparation ----------------------------

class PreparedWeight(NamedTuple):
    wt: jax.Array        # (Mp, Np) compute dtype, padded W^T
    bias: jax.Array      # (1, Np) float32 (zeros if no bias)
    kblk_ids: jax.Array  # (nj, nk_max) int32: nonzero k-block ids per j (padded)
    kblk_cnt: jax.Array  # (nj,) int32: number of valid entries per j
    N: int
    M: int
    Np: int
    Mp: int
    tn: int
    tk: int
    nj: int
    nk_max: int
    nnz_blocks: int      # total count of nonzero (tk, tn) weight blocks


def prepare_sparse_weight(dense_weight, bias=None, *, tn=512, tk=512,
                          compute_dtype=jnp.bfloat16) -> PreparedWeight:
    """One-time weight prep: transpose, pad, cast, build block-sparsity maps."""
    w = np.asarray(dense_weight, np.float32)
    N, M = w.shape

    # Clamp tiles to the real problem (lane dim must be a multiple of 128).
    tn = int(min(tn, _round_up(N, 128)))
    tk = int(min(tk, _round_up(M, 128)))
    Np, Mp = _round_up(N, tn), _round_up(M, tk)
    nj, nk = Np // tn, Mp // tk

    wt = np.zeros((Mp, Np), np.float32)
    wt[:M, :N] = w.T

    # Block-level nonzero map at the (tk, tn) DMA-skip granularity.
    nzb = (wt.reshape(nk, tk, nj, tn) != 0).any(axis=(1, 3))        # (nk, nj)
    counts = nzb.sum(axis=0).astype(np.int32)                       # (nj,)
    nk_max = max(int(counts.max()), 1)

    kblk_ids = np.zeros((nj, nk_max), dtype=np.int32)
    for j in range(nj):
        ids = np.nonzero(nzb[:, j])[0].astype(np.int32)
        if ids.size == 0:
            ids = np.zeros((1,), np.int32)                          # count stays 0
        # Pad by repeating the last valid index -> Pallas elides the re-DMA.
        pad = np.full((max(nk_max - ids.size, 0),), ids[-1], np.int32)
        kblk_ids[j, :] = np.concatenate([ids, pad])[:nk_max]

    b = np.zeros((1, Np), np.float32)
    if bias is not None:
        b[0, :N] = np.asarray(bias, np.float32)

    return PreparedWeight(
        wt=jnp.asarray(wt, compute_dtype),
        bias=jnp.asarray(b, jnp.float32),
        kblk_ids=jnp.asarray(kblk_ids, jnp.int32),
        kblk_cnt=jnp.asarray(counts, jnp.int32),
        N=N, M=M, Np=Np, Mp=Mp, tn=tn, tk=tk, nj=nj, nk_max=nk_max,
        nnz_blocks=int(counts.sum()),
    )


# ------------------------------- Pallas kernel ----------------------------------

def _sparse_linear_kernel(kblk_ids_ref, kblk_cnt_ref, x_ref, wt_ref, b_ref, o_ref):
    # kblk_ids_ref : (nj, nk_max) int32 SMEM (used only by the index_maps)
    # kblk_cnt_ref : (nj,) int32 SMEM
    # x_ref        : (tb, tk) compute dtype
    # wt_ref       : (tk, tn) compute dtype
    # b_ref        : (1, tn)  float32
    # o_ref        : (tb, tn) float32 -- resident across the k axis (accumulator)
    del kblk_ids_ref
    j = pl.program_id(1)
    k = pl.program_id(2)

    @pl.when(k == 0)
    def _init():
        # Bias-initialize the resident output block (no separate scratch).
        o_ref[...] = jnp.broadcast_to(b_ref[...], o_ref.shape).astype(o_ref.dtype)

    # Only the first kblk_cnt[j] steps carry a (distinct, nonzero) weight block;
    # the remaining steps are padding (same block index -> DMA already elided).
    @pl.when(k < kblk_cnt_ref[j])
    def _accumulate():
        o_ref[...] += jnp.dot(x_ref[...], wt_ref[...],
                              preferred_element_type=jnp.float32)


def sparse_linear_forward(x, prep: PreparedWeight, *, tb=512):
    """x: (..., M) -> (..., N) float32, using the prepared sparse weight."""
    orig_shape = x.shape
    M = int(orig_shape[-1])
    assert M == prep.M, f"input feature dim {M} != weight M {prep.M}"

    x2d = jnp.asarray(x, jnp.float32).reshape(-1, M)
    B = x2d.shape[0]

    compute_dtype = prep.wt.dtype
    cbytes = jnp.dtype(compute_dtype).itemsize

    # Clamp the batch tile to the real batch (16 = bf16 sublane packing).
    tb = int(min(tb, _round_up(B, 16)))
    Bp = _round_up(B, tb)
    ni = Bp // tb
    # Megacore (v7x has 2 TCs): prefer >= 2 parallel tiles when the problem allows.
    if ni * prep.nj < 2 and tb >= 32 and tb % 32 == 0:
        tb //= 2
        Bp = _round_up(B, tb)
        ni = Bp // tb

    x_p = jnp.pad(x2d, ((0, Bp - B), (0, prep.Mp - M))).astype(compute_dtype)

    tn, tk, nj, nk_max = prep.tn, prep.tk, prep.nj, prep.nk_max
    nnz = max(prep.nnz_blocks, 1)

    # Actual VMEM footprint (double-buffered inputs + resident f32 output) + headroom.
    vmem_needed = (2 * tb * tk * cbytes          # x
                   + 2 * tk * tn * cbytes        # W^T
                   + 2 * tn * 4                  # bias
                   + 2 * tb * tn * 4)            # output / accumulator
    vmem_limit = int(min(vmem_needed + (8 << 20), 32 << 20))

    # Truthful traffic: x is re-streamed per j, W per i, only nonzero blocks move.
    cost = pl.CostEstimate(
        flops=2 * Bp * tk * tn * nnz,
        transcendentals=0,
        bytes_accessed=(Bp * tk * nnz * cbytes          # x (per-j re-stream)
                        + ni * tk * tn * nnz * cbytes   # W^T (per-i re-stream)
                        + ni * nj * tn * 4              # bias
                        + Bp * prep.Np * 4))            # output writeback

    out = pl.pallas_call(
        _sparse_linear_kernel,
        out_shape=jax.ShapeDtypeStruct((Bp, prep.Np), jnp.float32),
        grid_spec=pltpu.PrefetchScalarGridSpec(
            num_scalar_prefetch=2,
            grid=(ni, nj, nk_max),
            in_specs=[
                # x tile: gather only the nonzero k-blocks for this j.
                pl.BlockSpec((tb, tk), lambda i, j, k, ids, cnt: (i, ids[j, k])),
                # W^T tile: same gathered k-block, column block j.
                pl.BlockSpec((tk, tn), lambda i, j, k, ids, cnt: (ids[j, k], j)),
                # bias tile.
                pl.BlockSpec((1, tn), lambda i, j, k, ids, cnt: (0, j)),
            ],
            out_specs=pl.BlockSpec((tb, tn), lambda i, j, k, ids, cnt: (i, j)),
        ),
        compiler_params=pltpu.CompilerParams(
            dimension_semantics=("parallel", "parallel", "arbitrary"),
            vmem_limit_bytes=vmem_limit,
        ),
        cost_estimate=cost,
    )(prep.kblk_ids, prep.kblk_cnt, x_p, prep.wt, prep.bias)

    return out[:B, :prep.N].reshape(orig_shape[:-1] + (prep.N,))


# ----------------------------------- main ---------------------------------------

if __name__ == "__main__":
    key = jax.random.PRNGKey(0)
    k_x, k_w, k_m, k_b = jax.random.split(key, 4)

    # Small shapes consistent with nn.Linear(M -> N): input (..., M).
    batch, seq, M, N = 2, 4, 32, 16          # input (2, 4, 32), weight (16, 32)

    x = jax.random.normal(k_x, (batch, seq, M), dtype=jnp.float32)

    # Deterministic sparse weight: dense random weight * ~50% random mask.
    w_full = np.asarray(jax.random.normal(k_w, (N, M), dtype=jnp.float32))
    mask = np.asarray(jax.random.bernoulli(k_m, 0.5, (N, M)))
    dense_weight = (w_full * mask).astype(np.float32)

    bias = np.asarray(jax.random.normal(k_b, (N,), dtype=jnp.float32))

    # CSR round-trip (mirrors SparseLinear.__init__ / to_dense).
    W_val, W_idx = to_csr_2d(dense_weight)
    w_reconstructed = from_csr_2d(W_val, W_idx, shape=(N, M))
    assert np.allclose(w_reconstructed, dense_weight)

    # One-time weight prep (transpose/pad/cast + block-sparsity DMA-skip maps).
    prep = prepare_sparse_weight(w_reconstructed, bias)

    y = sparse_linear_forward(x, prep)
    y = jax.block_until_ready(y)
    assert y.shape == (batch, seq, N)

    # Reference mirrors the kernel's bf16-input / f32-accumulate precision, so the
    # comparison isolates kernel correctness (this is a bf16 matmul, not an f32 one).
    xq = np.asarray(jnp.asarray(x).reshape(-1, M).astype(jnp.bfloat16).astype(jnp.float32))
    wq = np.asarray(jnp.asarray(dense_weight).astype(jnp.bfloat16).astype(jnp.float32))
    y_ref = (xq @ wq.T + bias).reshape(batch, seq, N)
    np.testing.assert_allclose(np.asarray(y), y_ref, rtol=1e-4, atol=1e-4)

    print("KERNEL_OK")
</pallas_src>

<mosaic_0001>
module attributes {stable_mosaic.version = 11 : i64} {
  func.func @_sparse_linear_kernel(%arg0: i32, %arg1: i32, %arg2: i32, %arg3: memref<1x1xi32, #tpu.memory_space<smem>>, %arg4: memref<1xi32, #tpu.memory_space<smem>>, %arg5: memref<16x128xbf16, #tpu.memory_space<vmem>>, %arg6: memref<128x128xbf16, #tpu.memory_space<vmem>>, %arg7: memref<1x128xf32, #tpu.memory_space<vmem>>, %arg8: memref<16x128xf32, #tpu.memory_space<vmem>>) attributes {dimension_semantics = [#tpu.dimension_semantics<parallel>, #tpu.dimension_semantics<parallel>, #tpu.dimension_semantics<arbitrary>], iteration_bounds = array<i64: 1, 1, 1>, scalar_prefetch = 2 : i64, scratch_operands = 0 : i64, tpu.core_type = #tpu.core_type<tc>, window_params = [{transform_indices = @transform_0, window_bounds = array<i64: 16, 128>}, {transform_indices = @transform_1, window_bounds = array<i64: 128, 128>}, {transform_indices = @transform_2, window_bounds = array<i64: 1, 128>}, {transform_indices = @transform_3, window_bounds = array<i64: 16, 128>}]} {
    %c0_i32 = arith.constant 0 : i32
    %0 = arith.cmpi eq, %arg2, %c0_i32 : i32
    %1 = arith.extui %0 : i1 to i32
    %c0_i32_0 = arith.constant 0 : i32
    %2 = arith.cmpi ne, %1, %c0_i32_0 : i32
    scf.if %2 {
      %c0 = arith.constant 0 : index
      %c0_2 = arith.constant 0 : index
      %8 = vector.load %arg7[%c0, %c0_2] : memref<1x128xf32, #tpu.memory_space<vmem>>, vector<1x128xf32>
      %9 = vector.shape_cast %8 : vector<1x128xf32> to vector<1x128xf32>
      %10 = vector.broadcast %9 : vector<1x128xf32> to vector<16x128xf32>
      %c0_3 = arith.constant 0 : index
      %c0_4 = arith.constant 0 : index
      %11 = vector.load %arg8[%c0_3, %c0_4] : memref<16x128xf32, #tpu.memory_space<vmem>>, vector<16x128xf32>
      tpu.vector_store %arg8[%c0_3, %c0_4], %10 {strides = array<i32>} : memref<16x128xf32, #tpu.memory_space<vmem>>, vector<16x128xf32>,
    } else {
    }
    %3 = arith.index_cast %arg1 : i32 to index
    %4 = memref.load %arg4[%3] : memref<1xi32, #tpu.memory_space<smem>>
    %5 = arith.cmpi slt, %arg2, %4 : i32
    %6 = arith.extui %5 : i1 to i32
    %c0_i32_1 = arith.constant 0 : i32
    %7 = arith.cmpi ne, %6, %c0_i32_1 : i32
    scf.if %7 {
      %c0 = arith.constant 0 : index
      %c0_2 = arith.constant 0 : index
      %8 = vector.load %arg8[%c0, %c0_2] : memref<16x128xf32, #tpu.memory_space<vmem>>, vector<16x128xf32>
      %c0_3 = arith.constant 0 : index
      %c0_4 = arith.constant 0 : index
      %9 = vector.load %arg5[%c0_3, %c0_4] : memref<16x128xbf16, #tpu.memory_space<vmem>>, vector<16x128xbf16>
      %c0_5 = arith.constant 0 : index
      %c0_6 = arith.constant 0 : index
      %10 = vector.load %arg6[%c0_5, %c0_6] : memref<128x128xbf16, #tpu.memory_space<vmem>>, vector<128x128xbf16>
      %cst = arith.constant dense<0.000000e+00> : vector<16x128xf32>
      %11 = tpu.matmul %9, %10, %cst {dimension_numbers = #tpu.dot_dimension_numbers<[1], [0], [0], [1], [0, 0, 1, 1], [], []>} : vector<16x128xbf16>, vector<128x128xbf16>, vector<16x128xf32> -> vector<16x128xf32>
      %12 = arith.addf %8, %11 : vector<16x128xf32>
      %c0_7 = arith.constant 0 : index
      %c0_8 = arith.constant 0 : index
      %13 = vector.load %arg8[%c0_7, %c0_8] : memref<16x128xf32, #tpu.memory_space<vmem>>, vector<16x128xf32>
      tpu.vector_store %arg8[%c0_7, %c0_8], %12 {strides = array<i32>} : memref<16x128xf32, #tpu.memory_space<vmem>>, vector<16x128xf32>,
    } else {
    }
    return
  }
  func.func @transform_0(%arg0: i32, %arg1: i32, %arg2: i32, %arg3: memref<1x1xi32, #tpu.memory_space<smem>>, %arg4: memref<1xi32, #tpu.memory_space<smem>>) -> (i32, i32) {
    %0 = arith.index_cast %arg1 : i32 to index
    %1 = arith.index_cast %arg2 : i32 to index
    %2 = memref.load %arg3[%0, %1] : memref<1x1xi32, #tpu.memory_space<smem>>
    %c0_i32 = arith.constant 0 : i32
    return %arg0, %2 : i32, i32
  }
  func.func @transform_1(%arg0: i32, %arg1: i32, %arg2: i32, %arg3: memref<1x1xi32, #tpu.memory_space<smem>>, %arg4: memref<1xi32, #tpu.memory_space<smem>>) -> (i32, i32) {
    %0 = arith.index_cast %arg1 : i32 to index
    %1 = arith.index_cast %arg2 : i32 to index
    %2 = memref.load %arg3[%0, %1] : memref<1x1xi32, #tpu.memory_space<smem>>
    %c0_i32 = arith.constant 0 : i32
    return %2, %arg1 : i32, i32
  }
  func.func @transform_2(%arg0: i32, %arg1: i32, %arg2: i32, %arg3: memref<1x1xi32, #tpu.memory_space<smem>>, %arg4: memref<1xi32, #tpu.memory_space<smem>>) -> (i32, i32) {
    %c0_i32 = arith.constant 0 : i32
    %c0_i32_0 = arith.constant 0 : i32
    return %c0_i32, %arg1 : i32, i32
  }
  func.func @transform_3(%arg0: i32, %arg1: i32, %arg2: i32, %arg3: memref<1x1xi32, #tpu.memory_space<smem>>, %arg4: memref<1xi32, #tpu.memory_space<smem>>) -> (i32, i32) {
    %c0_i32 = arith.constant 0 : i32
    return %arg0, %arg1 : i32, i32
  }
}

</mosaic_0001>

<llo_original>
// kernel: tpu_custom_call.1
$region0: #{tpu_custom_call.1}
  #allocation0 [shape = 'u32[]', space=smem, size = 0x4, offset = 0x4, fixed_abs, tag = 'smem constant byte address 0x4 - core index']
  #allocation1 [shape = 'u32[144,128]{1,0:T(1,128)}', space=vmem, size = 0x12000, scoped, tag = 'internal scratch']
  #allocation2 [shape = 's32[1]{0}', space=sflag, size = 0x4, scoped, tag = 'scoped memory for tpu_custom_call.1']
  #allocation3 [shape = 's32[1,1]{1,0:T(1,128)S(6)}', space=smem, size = 0x200, scoped, tag = 'prefetched SMEM operand 0']
  #allocation4 [shape = 's32[1]{0:T(128)S(6)}', space=smem, size = 0x200, scoped, tag = 'prefetched SMEM operand 1']
  %s0 = inlined_call_operand.<no memory space> [shape: s32[1,1], index: 0, kind: input, shape index: {}]
  %s1 = inlined_call_operand.<no memory space> [shape: s32[1], index: 1, kind: input, shape index: {}]
  %s2 = inlined_call_operand.hbm [shape: bf16[16,128], index: 2, kind: input, shape index: {}]
  %s3 = inlined_call_operand.hbm [shape: bf16[128,128], index: 3, kind: input, shape index: {}]
  %s4 = inlined_call_operand.vmem [shape: f32[1,128], index: 4, kind: input, shape index: {}]
  %s5 = inlined_call_operand.hbm [shape: f32[16,128], index: 5, kind: output, shape index: {}]
  %s6 = sld [smem:[#allocation0]]
  $region38: #{tpu_custom_call.1} parent=0
    _
  %s8 = ssub.s32 1, %s6
  %s9 = scalar_select 0, %s8, %s6
  %10 = sst [smem:[#allocation3]] %s0
  %11 = sst [smem:[#allocation4]] %s1
  $region1: #{tpu_custom_call.1} parent=0
    #allocation5 [shape = 'u8[4096]{0}', space=vmem, size = 0x1000, scoped, tag = 'input window, operand 2, single buffered']
    #allocation6 [shape = 's32[1]{0}', space=sflag, size = 0x4, scoped, tag = 'scoped memory for tpu_custom_call.1']
    #allocation7 [shape = 's32[1]{0}', space=sflag, size = 0x4, scoped, tag = 'scoped memory for tpu_custom_call.1']
    #allocation8 [shape = 'u8[32768]{0}', space=vmem, size = 0x8000, scoped, tag = 'input window, operand 3, single buffered']
    #allocation9 [shape = 's32[1]{0}', space=sflag, size = 0x4, scoped, tag = 'scoped memory for tpu_custom_call.1']
    #allocation10 [shape = 'u8[8192]{0}', space=vmem, size = 0x2000, scoped, tag = 'output window, operand 0, single buffered']
    %12 = vsyncpa [#allocation6], 0
    %13 = vsyncpa [#allocation9], 0
    %14 = vsyncpa [#allocation7], 0
    // Predicated region
    $region2: #{tpu_custom_call.1} parent=1 // pred_check
      _
    $region3: #{tpu_custom_call.1} parent=1 // pred_check_branch
      %16 = sbr.rel (0) target = $region5
    $region4: #{tpu_custom_call.1} parent=1 // pred_region
      %s17 = sadd.s32 0, 0
      %s18 = smul.u32 %s17, 128
      %s19 = sadd.s32 %s18, 0
      %s20 = sld [smem:[#allocation3 + %s19]]
      %s22 = ssub.s32 128, 128
      %23 = vsyncadd [#allocation6], %s22
      %s24 = smul.addr %s20, 64
      %s25 = scalar_lea.hbm %s2, %s24
      %s26 = sshll.u32 [#allocation5], 4
      %s27 = int_to_ptr.vmem [resolvable:$true] %s26
      %32 = dma.hbm_to_vmem [thread:$0]  %s25, 128, %s27, [#allocation6], 64, 64, 4
    $region5: #{tpu_custom_call.1} parent=1 // pred_fallthru
      _
    // Predicated region
    $region6: #{tpu_custom_call.1} parent=1 // pred_check
      _
    $region7: #{tpu_custom_call.1} parent=1 // pred_check_branch
      %34 = sbr.rel (0) target = $region9
    $region8: #{tpu_custom_call.1} parent=1 // pred_region
      %s35 = sadd.s32 0, 0
      %s36 = smul.u32 %s35, 128
      %s37 = sadd.s32 %s36, 0
      %s38 = sld [smem:[#allocation3 + %s37]]
      %s39 = smul.u32 16, %s38
      %s41 = ssub.s32 1024, 1024
      %42 = vsyncadd [#allocation9], %s41
      %s43 = smul.addr %s39, 64
      %s44 = scalar_lea.hbm %s3, %s43
      %s45 = sshll.u32 [#allocation8], 4
      %s46 = int_to_ptr.vmem [resolvable:$true] %s45
      %51 = dma.hbm_to_vmem [thread:$0]  %s44, 1024, %s46, [#allocation9], 64, 64, 4
    $region9: #{tpu_custom_call.1} parent=1 // pred_fallthru
      _
    // Predicated region
    $region10: #{tpu_custom_call.1} parent=1 // pred_check
      _
    $region11: #{tpu_custom_call.1} parent=1 // pred_check_branch
      %53 = sbr.rel (0) target = $region13
    $region12: #{tpu_custom_call.1} parent=1 // pred_region
      _
    $region13: #{tpu_custom_call.1} parent=1 // pred_fallthru
      _
    // Predicated region
    $region14: #{tpu_custom_call.1} parent=1 // pred_check
      _
    $region15: #{tpu_custom_call.1} parent=1 // pred_check_branch
      %55 = sbr.rel (0) target = $region17
    $region16: #{tpu_custom_call.1} parent=1 // pred_region
      %56 = dma.done [#allocation6], 128
    $region17: #{tpu_custom_call.1} parent=1 // pred_fallthru
      _
    // Predicated region
    $region18: #{tpu_custom_call.1} parent=1 // pred_check
      _
    $region19: #{tpu_custom_call.1} parent=1 // pred_check_branch
      %58 = sbr.rel (0) target = $region21
    $region20: #{tpu_custom_call.1} parent=1 // pred_region
      %59 = dma.done [#allocation9], 1024
    $region21: #{tpu_custom_call.1} parent=1 // pred_fallthru
      _
    %s60 = sadd.s32 0, 0
    %s61 = smul.u32 %s60, 128
    %s62 = sadd.s32 %s61, 0
    %s63 = sld [smem:[#allocation3 + %s62]]
    %s64 = sadd.s32 0, 0
    %s65 = smul.u32 %s64, 128
    %s66 = sadd.s32 %s65, 0
    %s67 = sld [smem:[#allocation3 + %s66]]
    %s68 = smul.u32 16, %s67
    %p70 = scmp.eq.s32.totalorder 0, 0
    // Predicated region
    $region22: #{tpu_custom_call.1} parent=1 // pred_check
      %p71 = pneg %p70
    $region23: #{tpu_custom_call.1} parent=1 // pred_check_branch
      %73 = sbr.rel (%p71) target = $region25
    $region24: #{tpu_custom_call.1} parent=1 // pred_region
      %v74 = vld [vmem:[%s4] sm:$0x1]
      %v76 = vlaneseq
      %v77 = vshrl.u32 %v76, 7
      %v78 = vsub.s32 0, %v77
      %v79 = vrot.slane %v74, %v78
      %81 = vst [vmem:[#allocation10] sm:$0xff] %v79
      %82 = vst [vmem:[#allocation10 + $0x8] sm:$0xff] %v79
    $region25: #{tpu_custom_call.1} parent=1 // pred_fallthru
      _
    %s83 = sld [smem:[#allocation4]]
    %p84 = scmp.lt.s32.totalorder 0, %s83
    // Predicated region
    $region26: #{tpu_custom_call.1} parent=1 // pred_check
      %p85 = pneg %p84
    $region27: #{tpu_custom_call.1} parent=1 // pred_check_branch
      %87 = sbr.rel (%p85) target = $region29
    $region28: #{tpu_custom_call.1} parent=1 // pred_region
      %v88 = vld [vmem:[#allocation10] sm:$0xff]
      %v89 = vld [vmem:[#allocation10 + $0x8] sm:$0xff]
      %v90 = vld [vmem:[#allocation5] sm:$0xf]
      %v91 = vld [vmem:[#allocation5 + $0x4] sm:$0xf]
      %v92 = vld [vmem:[#allocation8] sm:$0xf]
      %v93 = vld [vmem:[#allocation8 + $0x4] sm:$0xf]
      %v94 = vld [vmem:[#allocation8 + $0x8] sm:$0xf]
      %v95 = vld [vmem:[#allocation8 + $0xc] sm:$0xf]
      %v96 = vld [vmem:[#allocation8 + $0x10] sm:$0xf]
      %v97 = vld [vmem:[#allocation8 + $0x14] sm:$0xf]
      %v98 = vld [vmem:[#allocation8 + $0x18] sm:$0xf]
      %v99 = vld [vmem:[#allocation8 + $0x1c] sm:$0xf]
      %v100 = vld [vmem:[#allocation8 + $0x20] sm:$0xf]
      %v101 = vld [vmem:[#allocation8 + $0x24] sm:$0xf]
      %v102 = vld [vmem:[#allocation8 + $0x28] sm:$0xf]
      %v103 = vld [vmem:[#allocation8 + $0x2c] sm:$0xf]
      %v104 = vld [vmem:[#allocation8 + $0x30] sm:$0xf]
      %v105 = vld [vmem:[#allocation8 + $0x34] sm:$0xf]
      %v106 = vld [vmem:[#allocation8 + $0x38] sm:$0xf]
      %v107 = vld [vmem:[#allocation8 + $0x3c] sm:$0xf]
      %v110 = vunpack.c.l.b16 %v90
      %v111 = vunpack.c.l.b16 %v91
      %v112 = vpack.c.b16 %v111, %v110
      %v130 = vunpack.c.l.b16 %v92
      %v131 = vunpack.c.l.b16 %v93
      %v132 = vunpack.c.l.b16 %v94
      %v133 = vunpack.c.l.b16 %v95
      %v134 = vunpack.c.l.b16 %v96
      %v135 = vunpack.c.l.b16 %v97
      %v136 = vunpack.c.l.b16 %v98
      %v137 = vunpack.c.l.b16 %v99
      %v138 = vunpack.c.l.b16 %v100
      %v139 = vunpack.c.l.b16 %v101
      %v140 = vunpack.c.l.b16 %v102
      %v141 = vunpack.c.l.b16 %v103
      %v142 = vunpack.c.l.b16 %v104
      %v143 = vunpack.c.l.b16 %v105
      %v144 = vunpack.c.l.b16 %v106
      %v145 = vunpack.c.l.b16 %v107
      %v146 = vpack.c.b16 %v131, %v130
      %v147 = vpack.c.b16 %v133, %v132
      %v148 = vpack.c.b16 %v135, %v134
      %v149 = vpack.c.b16 %v137, %v136
      %v150 = vpack.c.b16 %v139, %v138
      %v151 = vpack.c.b16 %v141, %v140
      %v152 = vpack.c.b16 %v143, %v142
      %v153 = vpack.c.b16 %v145, %v144
      %162 = vmatprep.subr.bf16.mxu0 0
      %163 = vmatpush1.bf16.msra.mxu0 %v146
      %164 = vmatprep.subr.bf16.mxu0 0
      %165 = vmatpush1.bf16.msra.mxu0 %v147
      %166 = vmatprep.subr.bf16.mxu0 0
      %167 = vmatpush1.bf16.msra.mxu0 %v148
      %168 = vmatprep.subr.bf16.mxu0 0
      %169 = vmatpush1.bf16.msra.mxu0 %v149
      %170 = vmatprep.subr.bf16.mxu0 0
      %171 = vmatpush1.bf16.msra.mxu0 %v150
      %172 = vmatprep.subr.bf16.mxu0 0
      %173 = vmatpush1.bf16.msra.mxu0 %v151
      %174 = vmatprep.subr.bf16.mxu0 0
      %175 = vmatpush1.bf16.msra.mxu0 %v152
      %176 = vmatprep.subr.bf16.mxu0 0
      %177 = vmatpush1.bf16.msra.mxu0 %v153
      %178 = vmatprep.subr.bf16.mxu0 0
      %179 = vmatpush1.bf16.msra.mxu0 0
      %180 = vmatprep.subr.bf16.mxu0 0
      %181 = vmatpush1.bf16.msra.mxu0 0
      %182 = vmatprep.subr.bf16.mxu0 0
      %183 = vmatpush1.bf16.msra.mxu0 0
      %184 = vmatprep.subr.bf16.mxu0 0
      %185 = vmatpush1.bf16.msra.mxu0 0
      %186 = vmatprep.subr.bf16.mxu0 0
      %187 = vmatpush1.bf16.msra.mxu0 0
      %188 = vmatprep.subr.bf16.mxu0 0
      %189 = vmatpush1.bf16.msra.mxu0 0
      %190 = vmatprep.subr.bf16.mxu0 0
      %191 = vmatpush1.bf16.msra.mxu0 0
      %192 = vmatprep.subr.bf16.mxu0 0
      %193 = vmatpush1.bf16.msra.mxu0 0
      %194 = vmatprep.mubr.bf16.mxu0 0
      %195 = vmatmul.mubr.bf16.gmra.mrb[0].mxu0 %v112
      %v196 = vpop.f32.mrb[0].mxu0
      %v197 = vadd.f32 0.0, %v196
      %v198 = vpop.f32.mrb[0].mxu0
      %v199 = vpop.f32.mrb[0].mxu0
      %v200 = vadd.f32 0.0, %v199
      %v201 = vpop.f32.mrb[0].mxu0
      %202 = vdwg.mxu0
      %v203 = vadd.f32 %v88, %v197
      %v204 = vadd.f32 %v89, %v200
      %205 = vst [vmem:[#allocation10] sm:$0xff] %v203
      %206 = vst [vmem:[#allocation10 + $0x8] sm:$0xff] %v204
    $region29: #{tpu_custom_call.1} parent=1 // pred_fallthru
      _
    // Predicated region
    $region30: #{tpu_custom_call.1} parent=1 // pred_check
      _
    $region31: #{tpu_custom_call.1} parent=1 // pred_check_branch
      %208 = sbr.rel (0) target = $region33
    $region32: #{tpu_custom_call.1} parent=1 // pred_region
      %s210 = ssub.s32 256, 256
      %211 = vsyncadd [#allocation7], %s210
      %s212 = sshll.u32 [#allocation10], 4
      %s213 = int_to_ptr.vmem [resolvable:$true] %s212
      %218 = dma.vmem_to_hbm [thread:$0]  %s213, 256, %s5, [#allocation7], 128, 128, 8
    $region33: #{tpu_custom_call.1} parent=1 // pred_fallthru
      _
    // Predicated region
    $region34: #{tpu_custom_call.1} parent=1 // pred_check
      _
    $region35: #{tpu_custom_call.1} parent=1 // pred_check_branch
      %220 = sbr.rel (0) target = $region37
    $region36: #{tpu_custom_call.1} parent=1 // pred_region
      %221 = dma.done [#allocation7], 256
    $region37: #{tpu_custom_call.1} parent=1 // pred_fallthru
      _
    %222 = vsyncpa [#allocation6], 1
    %223 = vsyncpa [#allocation9], 1
    %224 = vsyncpa [#allocation7], 1

</llo_original>
